<compile_context>
chip_gen: v6e
topology: v6e:2x2x1
jax: 0.10.0
libtpu: 0.0.40
codegen_flags: <defaults>
</compile_context>

<pallas_src>
import jax
import jax.numpy as jnp
from jax.experimental import pallas as pl
from jax.experimental.pallas import tpu as pltpu


def _cdiv(a, b):
    return (a + b - 1) // b


def _round_up(n, m):
    return ((n + m - 1) // m) * m


def qnet_kernel(x_ref, w1_ref, b1_ref, w2_ref, b2_ref, w3_ref, b3_ref, out_ref):
    # Feature-major: x_ref is (S, TB) with batch on the lane axis; weights are (out, in).
    xt = x_ref[...]                                                      # (S, TB)   f32
    h1 = jnp.dot(w1_ref[...], xt, preferred_element_type=jnp.float32)   # (128, TB) f32
    h1 = jnp.maximum(h1 + b1_ref[...], 0.0)
    h2 = jnp.dot(w2_ref[...], h1, preferred_element_type=jnp.float32)   # (64, TB)  f32
    h2 = jnp.maximum(h2 + b2_ref[...], 0.0)
    q = jnp.dot(w3_ref[...], h2, preferred_element_type=jnp.float32)    # (A, TB)   f32
    out_ref[...] = (q + b3_ref[...]).astype(out_ref.dtype)
    # TODO(synk): optional fused argmax epilogue (greedy action selection) would shrink
    # the output further, but changes the module's interface, so it is not done here.


def qnetwork_forward(x, params, *, tile_b=1024):
    """x: (B, state_size) f32.  params: weights (out, in), biases (out, 1), all f32.

    Returns (B, action_size) f32 Q-values (same semantics as the PyTorch QNetwork).
    """
    B, S = x.shape
    A = params["w3"].shape[0]

    w1, b1 = params["w1"], params["b1"]
    w2, b2 = params["w2"], params["b2"]
    w3, b3 = params["w3"], params["b3"]

    # Batch tile: multiple of 128 (lane-dense), as large as tile_b allows, but capped
    # so batches >= 256 always produce >= 2 grid steps (v7x megacore sharding).
    TB = min(tile_b, _round_up(B, 128))
    if _round_up(B, 128) >= 2 * 128:
        TB = min(TB, _round_up(_cdiv(B, 2), 128))
    TB = max(TB, 128)
    grid = (_cdiv(B, TB),)

    # Wrapper-side layout plumbing only (no pad, no dtype-cast passes over x).
    xT = x.T                                              # (S, B), batch on lanes

    def resident(a):
        # Full-array block, same block index every grid step -> stays VMEM-resident.
        return pl.BlockSpec(a.shape, lambda i: (0, 0))

    outT = pl.pallas_call(
        qnet_kernel,
        out_shape=jax.ShapeDtypeStruct((A, B), jnp.float32),
        grid=grid,
        in_specs=[
            pl.BlockSpec((S, TB), lambda i: (0, i)),      # x^T tile, pipelined
            resident(w1), resident(b1),
            resident(w2), resident(b2),
            resident(w3), resident(b3),
        ],
        out_specs=pl.BlockSpec((A, TB), lambda i: (0, i)),  # lane-dense output tile
        compiler_params=pltpu.CompilerParams(
            dimension_semantics=("parallel",),
            vmem_limit_bytes=32 * 1024 * 1024,
        ),
    )(xT, w1, b1, w2, b2, w3, b3)

    return outT.T                                          # (B, A)


def init_params(key, state_size, action_size):
    """Deterministic init mirroring nn.Linear (PyTorch (out, in) weight layout)."""
    def linear(key, fan_in, fan_out):
        kw, kb = jax.random.split(key)
        bound = fan_in ** -0.5
        w = jax.random.uniform(kw, (fan_out, fan_in), jnp.float32, -bound, bound)
        b = jax.random.uniform(kb, (fan_out, 1), jnp.float32, -bound, bound)
        return w, b

    k1, k2, k3 = jax.random.split(key, 3)
    w1, b1 = linear(k1, state_size, 128)
    w2, b2 = linear(k2, 128, 64)
    w3, b3 = linear(k3, 64, action_size)
    return {"w1": w1, "b1": b1, "w2": w2, "b2": b2, "w3": w3, "b3": b3}


def reference_forward(x, p):
    """Pure-JAX float32 reference (matches the PyTorch module's math)."""
    h1 = jnp.maximum(x @ p["w1"].T + p["b1"].T, 0.0)
    h2 = jnp.maximum(h1 @ p["w2"].T + p["b2"].T, 0.0)
    return h2 @ p["w3"].T + p["b3"].T


if __name__ == "__main__":
    state_size = 16
    action_size = 4

    key = jax.random.PRNGKey(0)
    kx, kp, kx2 = jax.random.split(key, 3)
    params = init_params(kp, state_size, action_size)

    fwd = jax.jit(qnetwork_forward)

    # Small single-block case (B=8 -> TB=128, grid=(1,), partial edge block).
    x = jax.random.normal(kx, (8, state_size), jnp.float32)
    out = jax.block_until_ready(fwd(x, params))
    ref = reference_forward(x, params)
    assert out.shape == (8, action_size)
    # Loose tolerance vs the true f32 reference (MXU matmul accumulation order /
    # precision may differ from XLA's), still catches any structural bug.
    assert jnp.allclose(out, ref, atol=2e-2, rtol=2e-2), "mismatch vs f32 reference (B=8)"

    # Multi-step case: B=300 -> TB=256, grid=(2,) with a partial trailing block,
    # exercising the pipelined "parallel" batch axis and edge-block masking.
    x2 = jax.random.normal(kx2, (300, state_size), jnp.float32)
    out2 = jax.block_until_ready(fwd(x2, params))
    ref2 = reference_forward(x2, params)
    assert out2.shape == (300, action_size)
    assert jnp.allclose(out2, ref2, atol=2e-2, rtol=2e-2), "mismatch vs f32 reference (B=300)"

    print("KERNEL_OK")
</pallas_src>

<mosaic_0001>
module attributes {stable_mosaic.version = 11 : i64} {
  func.func @qnet_kernel(%arg0: i32, %arg1: memref<16x128xf32, #tpu.memory_space<vmem>>, %arg2: memref<128x16xf32, #tpu.memory_space<vmem>>, %arg3: memref<128x1xf32, #tpu.memory_space<vmem>>, %arg4: memref<64x128xf32, #tpu.memory_space<vmem>>, %arg5: memref<64x1xf32, #tpu.memory_space<vmem>>, %arg6: memref<4x64xf32, #tpu.memory_space<vmem>>, %arg7: memref<4x1xf32, #tpu.memory_space<vmem>>, %arg8: memref<4x128xf32, #tpu.memory_space<vmem>>) attributes {dimension_semantics = [#tpu.dimension_semantics<parallel>], iteration_bounds = array<i64: 1>, scalar_prefetch = 0 : i64, scratch_operands = 0 : i64, tpu.core_type = #tpu.core_type<tc>, window_params = [{transform_indices = @transform_0, window_bounds = array<i64: 16, 128>}, {pipeline_mode = #tpu.pipeline_mode<synchronous>, transform_indices = @transform_1, window_bounds = array<i64: 128, 16>}, {pipeline_mode = #tpu.pipeline_mode<synchronous>, transform_indices = @transform_2, window_bounds = array<i64: 128, 1>}, {pipeline_mode = #tpu.pipeline_mode<synchronous>, transform_indices = @transform_3, window_bounds = array<i64: 64, 128>}, {pipeline_mode = #tpu.pipeline_mode<synchronous>, transform_indices = @transform_4, window_bounds = array<i64: 64, 1>}, {pipeline_mode = #tpu.pipeline_mode<synchronous>, transform_indices = @transform_5, window_bounds = array<i64: 4, 64>}, {pipeline_mode = #tpu.pipeline_mode<synchronous>, transform_indices = @transform_6, window_bounds = array<i64: 4, 1>}, {transform_indices = @transform_7, window_bounds = array<i64: 4, 128>}]} {
    %c0 = arith.constant 0 : index
    %c0_0 = arith.constant 0 : index
    %0 = vector.load %arg1[%c0, %c0_0] : memref<16x128xf32, #tpu.memory_space<vmem>>, vector<16x128xf32>
    %c0_1 = arith.constant 0 : index
    %c0_2 = arith.constant 0 : index
    %1 = vector.load %arg2[%c0_1, %c0_2] : memref<128x16xf32, #tpu.memory_space<vmem>>, vector<128x16xf32>
    %cst = arith.constant dense<0.000000e+00> : vector<128x128xf32>
    %2 = tpu.matmul %1, %0, %cst {dimension_numbers = #tpu.dot_dimension_numbers<[1], [0], [0], [1], [0, 0, 1, 1], [], []>} : vector<128x16xf32>, vector<16x128xf32>, vector<128x128xf32> -> vector<128x128xf32>
    %c0_3 = arith.constant 0 : index
    %c0_4 = arith.constant 0 : index
    %3 = vector.load %arg3[%c0_3, %c0_4] : memref<128x1xf32, #tpu.memory_space<vmem>>, vector<128x1xf32>
    %4 = vector.broadcast %3 : vector<128x1xf32> to vector<128x128xf32>
    %5 = arith.addf %2, %4 : vector<128x128xf32>
    %cst_5 = arith.constant 0.000000e+00 : f32
    %6 = vector.broadcast %cst_5 : f32 to vector<128x128xf32>
    %7 = arith.maximumf %5, %6 : vector<128x128xf32>
    %c0_6 = arith.constant 0 : index
    %c0_7 = arith.constant 0 : index
    %8 = vector.load %arg4[%c0_6, %c0_7] : memref<64x128xf32, #tpu.memory_space<vmem>>, vector<64x128xf32>
    %cst_8 = arith.constant dense<0.000000e+00> : vector<64x128xf32>
    %9 = tpu.matmul %8, %7, %cst_8 {dimension_numbers = #tpu.dot_dimension_numbers<[1], [0], [0], [1], [0, 0, 1, 1], [], []>} : vector<64x128xf32>, vector<128x128xf32>, vector<64x128xf32> -> vector<64x128xf32>
    %c0_9 = arith.constant 0 : index
    %c0_10 = arith.constant 0 : index
    %10 = vector.load %arg5[%c0_9, %c0_10] : memref<64x1xf32, #tpu.memory_space<vmem>>, vector<64x1xf32>
    %11 = vector.broadcast %10 : vector<64x1xf32> to vector<64x128xf32>
    %12 = arith.addf %9, %11 : vector<64x128xf32>
    %cst_11 = arith.constant 0.000000e+00 : f32
    %13 = vector.broadcast %cst_11 : f32 to vector<64x128xf32>
    %14 = arith.maximumf %12, %13 : vector<64x128xf32>
    %c0_12 = arith.constant 0 : index
    %c0_13 = arith.constant 0 : index
    %15 = vector.load %arg6[%c0_12, %c0_13] : memref<4x64xf32, #tpu.memory_space<vmem>>, vector<4x64xf32>
    %cst_14 = arith.constant dense<0.000000e+00> : vector<4x128xf32>
    %16 = tpu.matmul %15, %14, %cst_14 {dimension_numbers = #tpu.dot_dimension_numbers<[1], [0], [0], [1], [0, 0, 1, 1], [], []>} : vector<4x64xf32>, vector<64x128xf32>, vector<4x128xf32> -> vector<4x128xf32>
    %c0_15 = arith.constant 0 : index
    %c0_16 = arith.constant 0 : index
    %17 = vector.load %arg7[%c0_15, %c0_16] : memref<4x1xf32, #tpu.memory_space<vmem>>, vector<4x1xf32>
    %18 = vector.broadcast %17 : vector<4x1xf32> to vector<4x128xf32>
    %19 = arith.addf %16, %18 : vector<4x128xf32>
    %c0_17 = arith.constant 0 : index
    %c0_18 = arith.constant 0 : index
    %20 = vector.load %arg8[%c0_17, %c0_18] : memref<4x128xf32, #tpu.memory_space<vmem>>, vector<4x128xf32>
    tpu.vector_store %arg8[%c0_17, %c0_18], %19 {strides = array<i32>} : memref<4x128xf32, #tpu.memory_space<vmem>>, vector<4x128xf32>,
    return
  }
  func.func @transform_0(%arg0: i32) -> (i32, i32) {
    %c0_i32 = arith.constant 0 : i32
    %c0_i32_0 = arith.constant 0 : i32
    return %c0_i32, %arg0 : i32, i32
  }
  func.func @transform_1(%arg0: i32) -> (i32, i32) {
    %c0_i32 = arith.constant 0 : i32
    %c0_i32_0 = arith.constant 0 : i32
    %c0_i32_1 = arith.constant 0 : i32
    return %c0_i32, %c0_i32_0 : i32, i32
  }
  func.func @transform_2(%arg0: i32) -> (i32, i32) {
    %c0_i32 = arith.constant 0 : i32
    %c0_i32_0 = arith.constant 0 : i32
    %c0_i32_1 = arith.constant 0 : i32
    return %c0_i32, %c0_i32_0 : i32, i32
  }
  func.func @transform_3(%arg0: i32) -> (i32, i32) {
    %c0_i32 = arith.constant 0 : i32
    %c0_i32_0 = arith.constant 0 : i32
    %c0_i32_1 = arith.constant 0 : i32
    return %c0_i32, %c0_i32_0 : i32, i32
  }
  func.func @transform_4(%arg0: i32) -> (i32, i32) {
    %c0_i32 = arith.constant 0 : i32
    %c0_i32_0 = arith.constant 0 : i32
    %c0_i32_1 = arith.constant 0 : i32
    return %c0_i32, %c0_i32_0 : i32, i32
  }
  func.func @transform_5(%arg0: i32) -> (i32, i32) {
    %c0_i32 = arith.constant 0 : i32
    %c0_i32_0 = arith.constant 0 : i32
    %c0_i32_1 = arith.constant 0 : i32
    return %c0_i32, %c0_i32_0 : i32, i32
  }
  func.func @transform_6(%arg0: i32) -> (i32, i32) {
    %c0_i32 = arith.constant 0 : i32
    %c0_i32_0 = arith.constant 0 : i32
    %c0_i32_1 = arith.constant 0 : i32
    return %c0_i32, %c0_i32_0 : i32, i32
  }
  func.func @transform_7(%arg0: i32) -> (i32, i32) {
    %c0_i32 = arith.constant 0 : i32
    %c0_i32_0 = arith.constant 0 : i32
    return %c0_i32, %arg0 : i32, i32
  }
}

</mosaic_0001>

<llo_original>
// kernel: qnetwork_forward.1
$region0: #{qnetwork_forward.1}
  #allocation0 [shape = 'u32[]', space=smem, size = 0x4, offset = 0x4, fixed_abs, tag = 'smem constant byte address 0x4 - core index']
  #allocation1 [shape = 'u32[144,128]{1,0:T(1,128)}', space=vmem, size = 0x12000, scoped, tag = 'internal scratch']
  %s0 = inlined_call_operand.vmem [shape: f32[16,8], index: 0, kind: input, shape index: {}]
  %s1 = inlined_call_operand.vmem [shape: f32[128,16], index: 1, kind: input, shape index: {}]
  %s2 = inlined_call_operand.vmem [shape: f32[128,1], index: 2, kind: input, shape index: {}]
  %s3 = inlined_call_operand.vmem [shape: f32[64,128], index: 3, kind: input, shape index: {}]
  %s4 = inlined_call_operand.vmem [shape: f32[64,1], index: 4, kind: input, shape index: {}]
  %s5 = inlined_call_operand.vmem [shape: f32[4,64], index: 5, kind: input, shape index: {}]
  %s6 = inlined_call_operand.vmem [shape: f32[4,1], index: 6, kind: input, shape index: {}]
  %s7 = inlined_call_operand.hbm [shape: f32[4,8], index: 7, kind: output, shape index: {}]
  %s8 = sld [smem:[#allocation0]]
  $region38: #{qnetwork_forward.1} parent=0
    _
  %s10 = ssub.s32 1, %s8
  %s11 = scalar_select 0, %s10, %s8
  $region1: #{qnetwork_forward.1} parent=0
    #allocation2 [shape = 'u8[2048]{0}', space=vmem, size = 0x800, scoped, tag = 'output window, operand 0, single buffered']
    #allocation3 [shape = 's32[1]{0}', space=sflag, size = 0x4, scoped, tag = 'scoped memory for qnetwork_forward.1']
    %12 = vsyncpa [#allocation3], 0
    // Predicated region
    $region2: #{qnetwork_forward.1} parent=1 // pred_check
      _
    $region3: #{qnetwork_forward.1} parent=1 // pred_check_branch
      %14 = sbr.rel (0) target = $region5
    $region4: #{qnetwork_forward.1} parent=1 // pred_region
      _
    $region5: #{qnetwork_forward.1} parent=1 // pred_fallthru
      _
    // Predicated region
    $region6: #{qnetwork_forward.1} parent=1 // pred_check
      _
    $region7: #{qnetwork_forward.1} parent=1 // pred_check_branch
      %16 = sbr.rel (0) target = $region9
    $region8: #{qnetwork_forward.1} parent=1 // pred_region
      _
    $region9: #{qnetwork_forward.1} parent=1 // pred_fallthru
      _
    // Predicated region
    $region10: #{qnetwork_forward.1} parent=1 // pred_check
      _
    $region11: #{qnetwork_forward.1} parent=1 // pred_check_branch
      %18 = sbr.rel (0) target = $region13
    $region12: #{qnetwork_forward.1} parent=1 // pred_region
      _
    $region13: #{qnetwork_forward.1} parent=1 // pred_fallthru
      _
    // Predicated region
    $region14: #{qnetwork_forward.1} parent=1 // pred_check
      _
    $region15: #{qnetwork_forward.1} parent=1 // pred_check_branch
      %20 = sbr.rel (0) target = $region17
    $region16: #{qnetwork_forward.1} parent=1 // pred_region
      _
    $region17: #{qnetwork_forward.1} parent=1 // pred_fallthru
      _
    // Predicated region
    $region18: #{qnetwork_forward.1} parent=1 // pred_check
      _
    $region19: #{qnetwork_forward.1} parent=1 // pred_check_branch
      %22 = sbr.rel (0) target = $region21
    $region20: #{qnetwork_forward.1} parent=1 // pred_region
      _
    $region21: #{qnetwork_forward.1} parent=1 // pred_fallthru
      _
    // Predicated region
    $region22: #{qnetwork_forward.1} parent=1 // pred_check
      _
    $region23: #{qnetwork_forward.1} parent=1 // pred_check_branch
      %24 = sbr.rel (0) target = $region25
    $region24: #{qnetwork_forward.1} parent=1 // pred_region
      _
    $region25: #{qnetwork_forward.1} parent=1 // pred_fallthru
      _
    // Predicated region
    $region26: #{qnetwork_forward.1} parent=1 // pred_check
      _
    $region27: #{qnetwork_forward.1} parent=1 // pred_check_branch
      %26 = sbr.rel (0) target = $region29
    $region28: #{qnetwork_forward.1} parent=1 // pred_region
      _
    $region29: #{qnetwork_forward.1} parent=1 // pred_fallthru
      _
    %v27 = vld [vmem:[%s0] sm:$0xff]
    %v28 = vld [vmem:[%s0 + $0x8] sm:$0xff]
    %v29 = vld [vmem:[%s1] sm:$0xff]
    %v30 = vld [vmem:[%s1 + $0x8] sm:$0xff]
    %v31 = vld [vmem:[%s1 + $0x10] sm:$0xff]
    %v32 = vld [vmem:[%s1 + $0x18] sm:$0xff]
    %v33 = vld [vmem:[%s1 + $0x20] sm:$0xff]
    %v34 = vld [vmem:[%s1 + $0x28] sm:$0xff]
    %v35 = vld [vmem:[%s1 + $0x30] sm:$0xff]
    %v36 = vld [vmem:[%s1 + $0x38] sm:$0xff]
    %v37 = vld [vmem:[%s1 + $0x40] sm:$0xff]
    %v38 = vld [vmem:[%s1 + $0x48] sm:$0xff]
    %v39 = vld [vmem:[%s1 + $0x50] sm:$0xff]
    %v40 = vld [vmem:[%s1 + $0x58] sm:$0xff]
    %v41 = vld [vmem:[%s1 + $0x60] sm:$0xff]
    %v42 = vld [vmem:[%s1 + $0x68] sm:$0xff]
    %v43 = vld [vmem:[%s1 + $0x70] sm:$0xff]
    %v44 = vld [vmem:[%s1 + $0x78] sm:$0xff]
    %v45 = vld [vmem:[%s2] sm:$0xff]
    %v46 = vld [vmem:[%s2 + $0x8] sm:$0xff]
    %v47 = vld [vmem:[%s2 + $0x10] sm:$0xff]
    %v48 = vld [vmem:[%s2 + $0x18] sm:$0xff]
    %v49 = vld [vmem:[%s2 + $0x20] sm:$0xff]
    %v50 = vld [vmem:[%s2 + $0x28] sm:$0xff]
    %v51 = vld [vmem:[%s2 + $0x30] sm:$0xff]
    %v52 = vld [vmem:[%s2 + $0x38] sm:$0xff]
    %v53 = vld [vmem:[%s2 + $0x40] sm:$0xff]
    %v54 = vld [vmem:[%s2 + $0x48] sm:$0xff]
    %v55 = vld [vmem:[%s2 + $0x50] sm:$0xff]
    %v56 = vld [vmem:[%s2 + $0x58] sm:$0xff]
    %v57 = vld [vmem:[%s2 + $0x60] sm:$0xff]
    %v58 = vld [vmem:[%s2 + $0x68] sm:$0xff]
    %v59 = vld [vmem:[%s2 + $0x70] sm:$0xff]
    %v60 = vld [vmem:[%s2 + $0x78] sm:$0xff]
    %62 = vset.pattern.permute.xlu0 0
    %63 = vperm.xlu0 %62, %v45
    %v64 = vpop.permute.xlu0 %63
    %67 = vset.pattern.permute.xlu0 0
    %68 = vperm.xlu0 %67, %v46
    %v69 = vpop.permute.xlu0 %68
    %72 = vset.pattern.permute.xlu0 0
    %73 = vperm.xlu0 %72, %v47
    %v74 = vpop.permute.xlu0 %73
    %77 = vset.pattern.permute.xlu0 0
    %78 = vperm.xlu0 %77, %v48
    %v79 = vpop.permute.xlu0 %78
    %82 = vset.pattern.permute.xlu0 0
    %83 = vperm.xlu0 %82, %v49
    %v84 = vpop.permute.xlu0 %83
    %87 = vset.pattern.permute.xlu0 0
    %88 = vperm.xlu0 %87, %v50
    %v89 = vpop.permute.xlu0 %88
    %92 = vset.pattern.permute.xlu0 0
    %93 = vperm.xlu0 %92, %v51
    %v94 = vpop.permute.xlu0 %93
    %97 = vset.pattern.permute.xlu0 0
    %98 = vperm.xlu0 %97, %v52
    %v99 = vpop.permute.xlu0 %98
    %102 = vset.pattern.permute.xlu0 0
    %103 = vperm.xlu0 %102, %v53
    %v104 = vpop.permute.xlu0 %103
    %107 = vset.pattern.permute.xlu0 0
    %108 = vperm.xlu0 %107, %v54
    %v109 = vpop.permute.xlu0 %108
    %112 = vset.pattern.permute.xlu0 0
    %113 = vperm.xlu0 %112, %v55
    %v114 = vpop.permute.xlu0 %113
    %117 = vset.pattern.permute.xlu0 0
    %118 = vperm.xlu0 %117, %v56
    %v119 = vpop.permute.xlu0 %118
    %122 = vset.pattern.permute.xlu0 0
    %123 = vperm.xlu0 %122, %v57
    %v124 = vpop.permute.xlu0 %123
    %127 = vset.pattern.permute.xlu0 0
    %128 = vperm.xlu0 %127, %v58
    %v129 = vpop.permute.xlu0 %128
    %132 = vset.pattern.permute.xlu0 0
    %133 = vperm.xlu0 %132, %v59
    %v134 = vpop.permute.xlu0 %133
    %137 = vset.pattern.permute.xlu0 0
    %138 = vperm.xlu0 %137, %v60
    %v139 = vpop.permute.xlu0 %138
    %vm141 = vcmask 130048
    %v143 = vsel %vm141, %v29, 0
    %v146 = vsel %vm141, %v30, 0
    %v149 = vsel %vm141, %v31, 0
    %v152 = vsel %vm141, %v32, 0
    %v155 = vsel %vm141, %v33, 0
    %v158 = vsel %vm141, %v34, 0
    %v161 = vsel %vm141, %v35, 0
    %v164 = vsel %vm141, %v36, 0
    %v167 = vsel %vm141, %v37, 0
    %v170 = vsel %vm141, %v38, 0
    %v173 = vsel %vm141, %v39, 0
    %v176 = vsel %vm141, %v40, 0
    %v179 = vsel %vm141, %v41, 0
    %v182 = vsel %vm141, %v42, 0
    %v185 = vsel %vm141, %v43, 0
    %v188 = vsel %vm141, %v44, 0
    %190 = vmatprep.subr.mxu0 0.0
    %191 = vmatpush1.msra.mxu0 0.0
    %192 = vmatprep.subr.mxu0 0.0
    %193 = vmatpush1.msra.mxu0 0.0
    %194 = vmatprep.subr.mxu0 0.0
    %195 = vmatpush1.msra.mxu0 0.0
    %196 = vmatprep.subr.mxu0 0.0
    %197 = vmatpush1.msra.mxu0 0.0
    %198 = vmatprep.subr.mxu0 0.0
    %199 = vmatpush1.msra.mxu0 0.0
    %200 = vmatprep.subr.mxu0 0.0
    %201 = vmatpush1.msra.mxu0 0.0
    %202 = vmatprep.subr.mxu0 0.0
    %203 = vmatpush1.msra.mxu0 0.0
    %204 = vmatprep.subr.mxu0 0.0
    %205 = vmatpush1.msra.mxu0 0.0
    %206 = vmatprep.subr.mxu0 0.0
    %207 = vmatpush1.msra.mxu0 0.0
    %208 = vmatprep.subr.mxu0 0.0
    %209 = vmatpush1.msra.mxu0 0.0
    %210 = vmatprep.subr.mxu0 0.0
    %211 = vmatpush1.msra.mxu0 0.0
    %212 = vmatprep.subr.mxu0 0.0
    %213 = vmatpush1.msra.mxu0 0.0
    %214 = vmatprep.subr.mxu0 0.0
    %215 = vmatpush1.msra.mxu0 0.0
    %216 = vmatprep.subr.mxu0 0.0
    %217 = vmatpush1.msra.mxu0 0.0
    %218 = vmatprep.subr.mxu0 0.0
    %219 = vmatpush1.msra.mxu0 %v28
    %220 = vmatprep.subr.mxu0 0.0
    %221 = vmatpush1.msra.mxu0 %v27
    %222 = vmatprep.subr.mxu0 0.0
    %223 = vmatpush2.msra.mxu0 0.0
    %224 = vmatprep.subr.mxu0 0.0
    %225 = vmatpush2.msra.mxu0 0.0
    %226 = vmatprep.subr.mxu0 0.0
    %227 = vmatpush2.msra.mxu0 0.0
    %228 = vmatprep.subr.mxu0 0.0
    %229 = vmatpush2.msra.mxu0 0.0
    %230 = vmatprep.subr.mxu0 0.0
    %231 = vmatpush2.msra.mxu0 0.0
    %232 = vmatprep.subr.mxu0 0.0
    %233 = vmatpush2.msra.mxu0 0.0
    %234 = vmatprep.subr.mxu0 0.0
    %235 = vmatpush2.msra.mxu0 0.0
    %236 = vmatprep.subr.mxu0 0.0
    %237 = vmatpush2.msra.mxu0 0.0
    %238 = vmatprep.subr.mxu0 0.0
    %239 = vmatpush2.msra.mxu0 0.0
    %240 = vmatprep.subr.mxu0 0.0
    %241 = vmatpush2.msra.mxu0 0.0
    %242 = vmatprep.subr.mxu0 0.0
    %243 = vmatpush2.msra.mxu0 0.0
    %244 = vmatprep.subr.mxu0 0.0
    %245 = vmatpush2.msra.mxu0 0.0
    %246 = vmatprep.subr.mxu0 0.0
    %247 = vmatpush2.msra.mxu0 0.0
    %248 = vmatprep.subr.mxu0 0.0
    %249 = vmatpush2.msra.mxu0 0.0
    %250 = vmatprep.subr.mxu0 0.0
    %251 = vmatpush2.msra.mxu0 0.0
    %252 = vmatprep.subr.mxu0 0.0
    %253 = vmatpush2.msra.mxu0 0.0
    %254 = vmatprep.mubr.f32.mxu0 0.0
    %255 = vmatmul.mubr.f32.gmra.mxu0 %v143
    %v256 = vpop.f32.mrf.mxu0
    %v257 = vadd.f32 %v64, %v256
    %v258 = vpop.f32.mrf.mxu0
    %259 = vmatprep.mubr.f32.mxu0 0.0
    %260 = vmatmul.mubr.f32.gmra.mxu0 %v146
    %v261 = vpop.f32.mrf.mxu0
    %v262 = vadd.f32 %v69, %v261
    %v263 = vpop.f32.mrf.mxu0
    %264 = vmatprep.mubr.f32.mxu0 0.0
    %265 = vmatmul.mubr.f32.gmra.mxu0 %v149
    %v266 = vpop.f32.mrf.mxu0
    %v267 = vadd.f32 %v74, %v266
    %v268 = vpop.f32.mrf.mxu0
    %269 = vmatprep.mubr.f32.mxu0 0.0
    %270 = vmatmul.mubr.f32.gmra.mxu0 %v152
    %v271 = vpop.f32.mrf.mxu0
    %v272 = vadd.f32 %v79, %v271
    %v273 = vpop.f32.mrf.mxu0
    %274 = vmatprep.mubr.f32.mxu0 0.0
    %275 = vmatmul.mubr.f32.gmra.mxu0 %v155
    %v276 = vpop.f32.mrf.mxu0
    %v277 = vadd.f32 %v84, %v276
    %v278 = vpop.f32.mrf.mxu0
    %279 = vmatprep.mubr.f32.mxu0 0.0
    %280 = vmatmul.mubr.f32.gmra.mxu0 %v158
    %v281 = vpop.f32.mrf.mxu0
    %v282 = vadd.f32 %v89, %v281
    %v283 = vpop.f32.mrf.mxu0
    %284 = vmatprep.mubr.f32.mxu0 0.0
    %285 = vmatmul.mubr.f32.gmra.mxu0 %v161
    %v286 = vpop.f32.mrf.mxu0
    %v287 = vadd.f32 %v94, %v286
    %v288 = vpop.f32.mrf.mxu0
    %289 = vmatprep.mubr.f32.mxu0 0.0
    %290 = vmatmul.mubr.f32.gmra.mxu0 %v164
    %v291 = vpop.f32.mrf.mxu0
    %v292 = vadd.f32 %v99, %v291
    %v293 = vpop.f32.mrf.mxu0
    %294 = vmatprep.mubr.f32.mxu0 0.0
    %295 = vmatmul.mubr.f32.gmra.mxu0 %v167
    %v296 = vpop.f32.mrf.mxu0
    %v297 = vadd.f32 %v104, %v296
    %v298 = vpop.f32.mrf.mxu0
    %299 = vmatprep.mubr.f32.mxu0 0.0
    %300 = vmatmul.mubr.f32.gmra.mxu0 %v170
    %v301 = vpop.f32.mrf.mxu0
    %v302 = vadd.f32 %v109, %v301
    %v303 = vpop.f32.mrf.mxu0
    %304 = vmatprep.mubr.f32.mxu0 0.0
    %305 = vmatmul.mubr.f32.gmra.mxu0 %v173
    %v306 = vpop.f32.mrf.mxu0
    %v307 = vadd.f32 %v114, %v306
    %v308 = vpop.f32.mrf.mxu0
    %309 = vmatprep.mubr.f32.mxu0 0.0
    %310 = vmatmul.mubr.f32.gmra.mxu0 %v176
    %v311 = vpop.f32.mrf.mxu0
    %v312 = vadd.f32 %v119, %v311
    %v313 = vpop.f32.mrf.mxu0
    %314 = vmatprep.mubr.f32.mxu0 0.0
    %315 = vmatmul.mubr.f32.gmra.mxu0 %v179
    %v316 = vpop.f32.mrf.mxu0
    %v317 = vadd.f32 %v124, %v316
    %v318 = vpop.f32.mrf.mxu0
    %319 = vmatprep.mubr.f32.mxu0 0.0
    %320 = vmatmul.mubr.f32.gmra.mxu0 %v182
    %v321 = vpop.f32.mrf.mxu0
    %v322 = vadd.f32 %v129, %v321
    %v323 = vpop.f32.mrf.mxu0
    %324 = vmatprep.mubr.f32.mxu0 0.0
    %325 = vmatmul.mubr.f32.gmra.mxu0 %v185
    %v326 = vpop.f32.mrf.mxu0
    %v327 = vadd.f32 %v134, %v326
    %v328 = vpop.f32.mrf.mxu0
    %329 = vmatprep.mubr.f32.mxu0 0.0
    %330 = vmatmul.mubr.f32.gmra.mxu0 %v188
    %v331 = vpop.f32.mrf.mxu0
    %v332 = vadd.f32 %v139, %v331
    %v333 = vpop.f32.mrf.mxu0
    %334 = vdwg.mxu0
    %v335 = vmax.f32 %v257, 0.0
    %v336 = vmax.f32 %v262, 0.0
    %v337 = vmax.f32 %v267, 0.0
    %v338 = vmax.f32 %v272, 0.0
    %v339 = vmax.f32 %v277, 0.0
    %v340 = vmax.f32 %v282, 0.0
    %v341 = vmax.f32 %v287, 0.0
    %v342 = vmax.f32 %v292, 0.0
    %v343 = vmax.f32 %v297, 0.0
    %v344 = vmax.f32 %v302, 0.0
    %v345 = vmax.f32 %v307, 0.0
    %v346 = vmax.f32 %v312, 0.0
    %v347 = vmax.f32 %v317, 0.0
    %v348 = vmax.f32 %v322, 0.0
    %v349 = vmax.f32 %v327, 0.0
    %v350 = vmax.f32 %v332, 0.0
    %v351 = vld [vmem:[%s3] sm:$0xff]
    %v352 = vld [vmem:[%s3 + $0x8] sm:$0xff]
    %v353 = vld [vmem:[%s3 + $0x10] sm:$0xff]
    %v354 = vld [vmem:[%s3 + $0x18] sm:$0xff]
    %v355 = vld [vmem:[%s3 + $0x20] sm:$0xff]
    %v356 = vld [vmem:[%s3 + $0x28] sm:$0xff]
    %v357 = vld [vmem:[%s3 + $0x30] sm:$0xff]
    %v358 = vld [vmem:[%s3 + $0x38] sm:$0xff]
    %v359 = vld [vmem:[%s4] sm:$0xff]
    %v360 = vld [vmem:[%s4 + $0x8] sm:$0xff]
    %v361 = vld [vmem:[%s4 + $0x10] sm:$0xff]
    %v362 = vld [vmem:[%s4 + $0x18] sm:$0xff]
    %v363 = vld [vmem:[%s4 + $0x20] sm:$0xff]
    %v364 = vld [vmem:[%s4 + $0x28] sm:$0xff]
    %v365 = vld [vmem:[%s4 + $0x30] sm:$0xff]
    %v366 = vld [vmem:[%s4 + $0x38] sm:$0xff]
    %368 = vset.pattern.permute.xlu0 0
    %369 = vperm.xlu0 %368, %v359
    %v370 = vpop.permute.xlu0 %369
    %373 = vset.pattern.permute.xlu0 0
    %374 = vperm.xlu0 %373, %v360
    %v375 = vpop.permute.xlu0 %374
    %378 = vset.pattern.permute.xlu0 0
    %379 = vperm.xlu0 %378, %v361
    %v380 = vpop.permute.xlu0 %379
    %383 = vset.pattern.permute.xlu0 0
    %384 = vperm.xlu0 %383, %v362
    %v385 = vpop.permute.xlu0 %384
    %388 = vset.pattern.permute.xlu0 0
    %389 = vperm.xlu0 %388, %v363
    %v390 = vpop.permute.xlu0 %389
    %393 = vset.pattern.permute.xlu0 0
    %394 = vperm.xlu0 %393, %v364
    %v395 = vpop.permute.xlu0 %394
    %398 = vset.pattern.permute.xlu0 0
    %399 = vperm.xlu0 %398, %v365
    %v400 = vpop.permute.xlu0 %399
    %403 = vset.pattern.permute.xlu0 0
    %404 = vperm.xlu0 %403, %v366
    %v405 = vpop.permute.xlu0 %404
    %407 = vmatprep.subr.mxu0 0.0
    %408 = vmatpush1.msra.mxu0 %v350
    %409 = vmatprep.subr.mxu0 0.0
    %410 = vmatpush1.msra.mxu0 %v349
    %411 = vmatprep.subr.mxu0 0.0
    %412 = vmatpush1.msra.mxu0 %v348
    %413 = vmatprep.subr.mxu0 0.0
    %414 = vmatpush1.msra.mxu0 %v347
    %415 = vmatprep.subr.mxu0 0.0
    %416 = vmatpush1.msra.mxu0 %v346
    %417 = vmatprep.subr.mxu0 0.0
    %418 = vmatpush1.msra.mxu0 %v345
    %419 = vmatprep.subr.mxu0 0.0
    %420 = vmatpush1.msra.mxu0 %v344
    %421 = vmatprep.subr.mxu0 0.0
    %422 = vmatpush1.msra.mxu0 %v343
    %423 = vmatprep.subr.mxu0 0.0
    %424 = vmatpush1.msra.mxu0 %v342
    %425 = vmatprep.subr.mxu0 0.0
    %426 = vmatpush1.msra.mxu0 %v341
    %427 = vmatprep.subr.mxu0 0.0
    %428 = vmatpush1.msra.mxu0 %v340
    %429 = vmatprep.subr.mxu0 0.0
    %430 = vmatpush1.msra.mxu0 %v339
    %431 = vmatprep.subr.mxu0 0.0
    %432 = vmatpush1.msra.mxu0 %v338
    %433 = vmatprep.subr.mxu0 0.0
    %434 = vmatpush1.msra.mxu0 %v337
    %435 = vmatprep.subr.mxu0 0.0
    %436 = vmatpush1.msra.mxu0 %v336
    %437 = vmatprep.subr.mxu0 0.0
    %438 = vmatpush1.msra.mxu0 %v335
    %439 = vmatprep.subr.mxu0 0.0
    %440 = vmatpush2.msra.mxu0 0.0
    %441 = vmatprep.subr.mxu0 0.0
    %442 = vmatpush2.msra.mxu0 0.0
    %443 = vmatprep.subr.mxu0 0.0
    %444 = vmatpush2.msra.mxu0 0.0
    %445 = vmatprep.subr.mxu0 0.0
    %446 = vmatpush2.msra.mxu0 0.0
    %447 = vmatprep.subr.mxu0 0.0
    %448 = vmatpush2.msra.mxu0 0.0
    %449 = vmatprep.subr.mxu0 0.0
    %450 = vmatpush2.msra.mxu0 0.0
    %451 = vmatprep.subr.mxu0 0.0
    %452 = vmatpush2.msra.mxu0 0.0
    %453 = vmatprep.subr.mxu0 0.0
    %454 = vmatpush2.msra.mxu0 0.0
    %455 = vmatprep.subr.mxu0 0.0
    %456 = vmatpush2.msra.mxu0 0.0
    %457 = vmatprep.subr.mxu0 0.0
    %458 = vmatpush2.msra.mxu0 0.0
    %459 = vmatprep.subr.mxu0 0.0
    %460 = vmatpush2.msra.mxu0 0.0
    %461 = vmatprep.subr.mxu0 0.0
    %462 = vmatpush2.msra.mxu0 0.0
    %463 = vmatprep.subr.mxu0 0.0
    %464 = vmatpush2.msra.mxu0 0.0
    %465 = vmatprep.subr.mxu0 0.0
    %466 = vmatpush2.msra.mxu0 0.0
    %467 = vmatprep.subr.mxu0 0.0
    %468 = vmatpush2.msra.mxu0 0.0
    %469 = vmatprep.subr.mxu0 0.0
    %470 = vmatpush2.msra.mxu0 0.0
    %471 = vmatprep.mubr.f32.mxu0 0.0
    %472 = vmatmul.mubr.f32.gmra.mxu0 %v351
    %v473 = vpop.f32.mrf.mxu0
    %v474 = vadd.f32 %v370, %v473
    %v475 = vpop.f32.mrf.mxu0
    %476 = vmatprep.mubr.f32.mxu0 0.0
    %477 = vmatmul.mubr.f32.gmra.mxu0 %v352
    %v478 = vpop.f32.mrf.mxu0
    %v479 = vadd.f32 %v375, %v478
    %v480 = vpop.f32.mrf.mxu0
    %481 = vmatprep.mubr.f32.mxu0 0.0
    %482 = vmatmul.mubr.f32.gmra.mxu0 %v353
    %v483 = vpop.f32.mrf.mxu0
    %v484 = vadd.f32 %v380, %v483
    %v485 = vpop.f32.mrf.mxu0
    %486 = vmatprep.mubr.f32.mxu0 0.0
    %487 = vmatmul.mubr.f32.gmra.mxu0 %v354
    %v488 = vpop.f32.mrf.mxu0
    %v489 = vadd.f32 %v385, %v488
    %v490 = vpop.f32.mrf.mxu0
    %491 = vmatprep.mubr.f32.mxu0 0.0
    %492 = vmatmul.mubr.f32.gmra.mxu0 %v355
    %v493 = vpop.f32.mrf.mxu0
    %v494 = vadd.f32 %v390, %v493
    %v495 = vpop.f32.mrf.mxu0
    %496 = vmatprep.mubr.f32.mxu0 0.0
    %497 = vmatmul.mubr.f32.gmra.mxu0 %v356
    %v498 = vpop.f32.mrf.mxu0
    %v499 = vadd.f32 %v395, %v498
    %v500 = vpop.f32.mrf.mxu0
    %501 = vmatprep.mubr.f32.mxu0 0.0
    %502 = vmatmul.mubr.f32.gmra.mxu0 %v357
    %v503 = vpop.f32.mrf.mxu0
    %v504 = vadd.f32 %v400, %v503
    %v505 = vpop.f32.mrf.mxu0
    %506 = vmatprep.mubr.f32.mxu0 0.0
    %507 = vmatmul.mubr.f32.gmra.mxu0 %v358
    %v508 = vpop.f32.mrf.mxu0
    %v509 = vadd.f32 %v405, %v508
    %v510 = vpop.f32.mrf.mxu0
    %511 = vdwg.mxu0
    %v512 = vmax.f32 %v474, 0.0
    %v513 = vmax.f32 %v479, 0.0
    %v514 = vmax.f32 %v484, 0.0
    %v515 = vmax.f32 %v489, 0.0
    %v516 = vmax.f32 %v494, 0.0
    %v517 = vmax.f32 %v499, 0.0
    %v518 = vmax.f32 %v504, 0.0
    %v519 = vmax.f32 %v509, 0.0
    %v520 = vld [vmem:[%s5] sm:$0xf]
    %v521 = vld [vmem:[%s6] sm:$0xf]
    %523 = vset.pattern.permute.xlu0 0
    %524 = vperm.xlu0 %523, %v521
    %v525 = vpop.permute.xlu0 %524
    %vm527 = vcmask 523264
    %v529 = vsel %vm527, %v520, 0
    %531 = vmatprep.subr.mxu0 0.0
    %532 = vmatpush1.msra.mxu0 0.0
    %533 = vmatprep.subr.mxu0 0.0
    %534 = vmatpush1.msra.mxu0 0.0
    %535 = vmatprep.subr.mxu0 0.0
    %536 = vmatpush1.msra.mxu0 0.0
    %537 = vmatprep.subr.mxu0 0.0
    %538 = vmatpush1.msra.mxu0 0.0
    %539 = vmatprep.subr.mxu0 0.0
    %540 = vmatpush1.msra.mxu0 0.0
    %541 = vmatprep.subr.mxu0 0.0
    %542 = vmatpush1.msra.mxu0 0.0
    %543 = vmatprep.subr.mxu0 0.0
    %544 = vmatpush1.msra.mxu0 0.0
    %545 = vmatprep.subr.mxu0 0.0
    %546 = vmatpush1.msra.mxu0 0.0
    %547 = vmatprep.subr.mxu0 0.0
    %548 = vmatpush1.msra.mxu0 %v519
    %549 = vmatprep.subr.mxu0 0.0
    %550 = vmatpush1.msra.mxu0 %v518
    %551 = vmatprep.subr.mxu0 0.0
    %552 = vmatpush1.msra.mxu0 %v517
    %553 = vmatprep.subr.mxu0 0.0
    %554 = vmatpush1.msra.mxu0 %v516
    %555 = vmatprep.subr.mxu0 0.0
    %556 = vmatpush1.msra.mxu0 %v515
    %557 = vmatprep.subr.mxu0 0.0
    %558 = vmatpush1.msra.mxu0 %v514
    %559 = vmatprep.subr.mxu0 0.0
    %560 = vmatpush1.msra.mxu0 %v513
    %561 = vmatprep.subr.mxu0 0.0
    %562 = vmatpush1.msra.mxu0 %v512
    %563 = vmatprep.subr.mxu0 0.0
    %564 = vmatpush2.msra.mxu0 0.0
    %565 = vmatprep.subr.mxu0 0.0
    %566 = vmatpush2.msra.mxu0 0.0
    %567 = vmatprep.subr.mxu0 0.0
    %568 = vmatpush2.msra.mxu0 0.0
    %569 = vmatprep.subr.mxu0 0.0
    %570 = vmatpush2.msra.mxu0 0.0
    %571 = vmatprep.subr.mxu0 0.0
    %572 = vmatpush2.msra.mxu0 0.0
    %573 = vmatprep.subr.mxu0 0.0
    %574 = vmatpush2.msra.mxu0 0.0
    %575 = vmatprep.subr.mxu0 0.0
    %576 = vmatpush2.msra.mxu0 0.0
    %577 = vmatprep.subr.mxu0 0.0
    %578 = vmatpush2.msra.mxu0 0.0
    %579 = vmatprep.subr.mxu0 0.0
    %580 = vmatpush2.msra.mxu0 0.0
    %581 = vmatprep.subr.mxu0 0.0
    %582 = vmatpush2.msra.mxu0 0.0
    %583 = vmatprep.subr.mxu0 0.0
    %584 = vmatpush2.msra.mxu0 0.0
    %585 = vmatprep.subr.mxu0 0.0
    %586 = vmatpush2.msra.mxu0 0.0
    %587 = vmatprep.subr.mxu0 0.0
    %588 = vmatpush2.msra.mxu0 0.0
    %589 = vmatprep.subr.mxu0 0.0
    %590 = vmatpush2.msra.mxu0 0.0
    %591 = vmatprep.subr.mxu0 0.0
    %592 = vmatpush2.msra.mxu0 0.0
    %593 = vmatprep.subr.mxu0 0.0
    %594 = vmatpush2.msra.mxu0 0.0
    %595 = vmatprep.mubr.f32.mxu0 0.0
    %596 = vmatmul.mubr.f32.gmra.mxu0 %v529
    %v597 = vpop.f32.mrf.mxu0
    %v598 = vadd.f32 %v525, %v597
    %v599 = vpop.f32.mrf.mxu0
    %600 = vdwg.mxu0
    %601 = vst [vmem:[#allocation2] sm:$0xf] %v598
    // Predicated region
    $region30: #{qnetwork_forward.1} parent=1 // pred_check
      _
    $region31: #{qnetwork_forward.1} parent=1 // pred_check_branch
      %603 = sbr.rel (0) target = $region33
    $region32: #{qnetwork_forward.1} parent=1 // pred_region
      %s605 = ssub.s32 64, 64
      %606 = vsyncadd [#allocation3], %s605
      %s608 = sshll.u32 [#allocation2], 4
      %s609 = int_to_ptr.vmem [resolvable:$true] %s608
      %611 = dma.vmem_to_hbm [thread:$0]  %s609, 64, %s7, [#allocation3]
    $region33: #{qnetwork_forward.1} parent=1 // pred_fallthru
      _
    // Predicated region
    $region34: #{qnetwork_forward.1} parent=1 // pred_check
      _
    $region35: #{qnetwork_forward.1} parent=1 // pred_check_branch
      %613 = sbr.rel (0) target = $region37
    $region36: #{qnetwork_forward.1} parent=1 // pred_region
      %614 = dma.done [#allocation3], 64
    $region37: #{qnetwork_forward.1} parent=1 // pred_fallthru
      _
    %615 = vsyncpa [#allocation3], 1

</llo_original>
